<compile_context>
chip_gen: v7x
topology: tpu7x:2x2x1
jax: 0.10.0
libtpu: 0.0.40
codegen_flags: <defaults>
</compile_context>

<pallas_src>
import jax
import jax.numpy as jnp
from jax.experimental import pallas as pl
from jax.experimental.pallas import tpu as pltpu


def _round_up(x, m):
    return (x + m - 1) // m * m


def _kl_full_kernel(q_mu_ref, q_logvar_ref, p_mu_ref, p_logvar_ref, out_ref):
    """General prior: KL(N(q_mu, exp(q_logvar/2)) || N(p_mu, exp(p_logvar/2)))."""
    q_mu = q_mu_ref[...].astype(jnp.float32)
    q_logvar = q_logvar_ref[...].astype(jnp.float32)
    p_mu = p_mu_ref[...].astype(jnp.float32)
    p_logvar = p_logvar_ref[...].astype(jnp.float32)

    diff = q_mu - p_mu
    kl_elem = (
        0.5 * (p_logvar - q_logvar)
        + (jnp.exp(q_logvar) + diff * diff) * (0.5 * jnp.exp(-p_logvar))
        - 0.5
    )
    # Per-row KL (sum over latent / lane dim) -> (TB, 1).
    out_ref[...] = jnp.sum(kl_elem, axis=1, keepdims=True)


def _kl_std_kernel(q_mu_ref, q_logvar_ref, out_ref):
    """Standard-normal prior: KL(N(q_mu, exp(q_logvar/2)) || N(0, 1))."""
    q_mu = q_mu_ref[...].astype(jnp.float32)
    q_logvar = q_logvar_ref[...].astype(jnp.float32)

    kl_elem = 0.5 * (jnp.exp(q_logvar) + q_mu * q_mu - q_logvar - 1.0)
    out_ref[...] = jnp.sum(kl_elem, axis=1, keepdims=True)


def normal_kl_loss(q_mu, q_logvar, p_mu=None, p_logvar=None, reduction="mean",
                   tile_rows=None):
    assert reduction in ("none", "sum", "mean")
    B, L = q_mu.shape
    itemsize = jnp.dtype(q_mu.dtype).itemsize

    # Specialize the (common) standard-normal-prior path: do NOT materialize and
    # stream two all-zero arrays through HBM.
    use_std_prior = (p_mu is None) and (p_logvar is None)
    if not use_std_prior:
        if p_mu is None:
            p_mu = jnp.zeros_like(q_mu)
        if p_logvar is None:
            p_logvar = jnp.zeros_like(q_logvar)

    # Tile size: ~2 MiB per input tile (keeps 4 inputs x 2 pipeline buffers well
    # under the 32 MiB scoped VMEM limit, and well under v7x's 64 MiB physical VMEM).
    if tile_rows is None:
        tb = (2 * 1024 * 1024) // max(1, L * itemsize)
    else:
        tb = int(tile_rows)
    tb = max(8, min(1024, (tb // 8) * 8))     # multiple of 8 (sublane), clamped
    tb = min(tb, _round_up(B, 8))             # don't over-pad tiny batches
    b_pad = _round_up(B, tb)
    num_tiles = b_pad // tb

    def _pad(x):
        if b_pad == B:
            return x
        # Zero rows contribute exactly 0 KL in both kernel variants.
        return jnp.pad(x, ((0, b_pad - B), (0, 0)))

    if use_std_prior:
        kernel = _kl_std_kernel
        inputs = (_pad(q_mu), _pad(q_logvar))
        flops = 5 * b_pad * L
        transcendentals = 1 * b_pad * L
    else:
        kernel = _kl_full_kernel
        inputs = (_pad(q_mu), _pad(q_logvar), _pad(p_mu), _pad(p_logvar))
        flops = 9 * b_pad * L
        transcendentals = 2 * b_pad * L
    n_in = len(inputs)
    bytes_accessed = n_in * b_pad * L * itemsize + b_pad * 4

    # Block last dim == full latent extent, second-last a multiple of 8.
    in_spec = pl.BlockSpec((tb, L), lambda i: (i, 0))
    # TODO(synk): per-row output stays (TB, 1) (masked vst); lane-dense (1, TB)
    # would need an in-kernel sublane->lane relayout and output bytes are tiny here.
    out_spec = pl.BlockSpec((tb, 1), lambda i: (i, 0))
    out_shape = jax.ShapeDtypeStruct((b_pad, 1), jnp.float32)

    per_row = pl.pallas_call(
        kernel,
        out_shape=out_shape,
        grid_spec=pltpu.PrefetchScalarGridSpec(
            num_scalar_prefetch=0,
            grid=(num_tiles,),
            in_specs=[in_spec] * n_in,
            out_specs=out_spec,
        ),
        compiler_params=pltpu.CompilerParams(
            # Pure streaming op: batch tiles are independent -> both v7x TCs help.
            dimension_semantics=("parallel",),
            # Safe on all generations (>= v5e default 16 MiB, <= v7x physical 64 MiB);
            # 4 inputs x 2 buffers x <=2 MiB = <=16 MiB of pipelined buffers.
            vmem_limit_bytes=32 * 1024 * 1024,
        ),
        cost_estimate=pl.CostEstimate(
            flops=flops,
            transcendentals=transcendentals,
            bytes_accessed=bytes_accessed,
        ),
    )(*inputs)

    if reduction == "none":
        return per_row[:B, 0]                  # (B,)
    total = jnp.sum(per_row)                   # padded rows are exactly 0
    if reduction == "sum":
        return total
    return total / B                           # global mean over the true batch


def _reference(q_mu, q_logvar, p_mu=None, p_logvar=None, reduction="mean"):
    q_mu = q_mu.astype(jnp.float32)
    q_logvar = q_logvar.astype(jnp.float32)
    if p_mu is None:
        p_mu = jnp.zeros_like(q_mu)
    if p_logvar is None:
        p_logvar = jnp.zeros_like(q_logvar)
    p_mu = p_mu.astype(jnp.float32)
    p_logvar = p_logvar.astype(jnp.float32)
    kl = (
        0.5 * (p_logvar - q_logvar)
        + (jnp.exp(q_logvar) + (q_mu - p_mu) ** 2) / (2.0 * jnp.exp(p_logvar))
        - 0.5
    ).sum(axis=1)
    if reduction == "mean":
        return kl.mean()
    if reduction == "sum":
        return kl.sum()
    return kl


if __name__ == "__main__":
    key = jax.random.PRNGKey(0)
    k1, k2, k3, k4, k5, k6 = jax.random.split(key, 6)

    # Small shapes consistent with the module: (batch_size, latent_size).
    B, L = 8, 32
    q_mu = jax.random.normal(k1, (B, L), dtype=jnp.float32)
    q_logvar = 0.1 * jax.random.normal(k2, (B, L), dtype=jnp.float32)
    p_mu = jax.random.normal(k3, (B, L), dtype=jnp.float32)
    p_logvar = 0.1 * jax.random.normal(k4, (B, L), dtype=jnp.float32)

    # 1) Default (None) prior -> specialized standard-normal kernel, reduction='mean'.
    out_mean_default = normal_kl_loss(q_mu, q_logvar, reduction="mean")
    # 2) Explicit prior, all reductions.
    out_mean = normal_kl_loss(q_mu, q_logvar, p_mu, p_logvar, reduction="mean")
    out_sum = normal_kl_loss(q_mu, q_logvar, p_mu, p_logvar, reduction="sum")
    out_none = normal_kl_loss(q_mu, q_logvar, p_mu, p_logvar, reduction="none")
    jax.block_until_ready((out_mean_default, out_mean, out_sum, out_none))

    assert jnp.allclose(out_mean_default, _reference(q_mu, q_logvar, reduction="mean"),
                        rtol=1e-5, atol=1e-5)
    assert jnp.allclose(out_mean, _reference(q_mu, q_logvar, p_mu, p_logvar, "mean"),
                        rtol=1e-5, atol=1e-5)
    assert jnp.allclose(out_sum, _reference(q_mu, q_logvar, p_mu, p_logvar, "sum"),
                        rtol=1e-5, atol=1e-5)
    assert jnp.allclose(out_none, _reference(q_mu, q_logvar, p_mu, p_logvar, "none"),
                        rtol=1e-5, atol=1e-5)

    # 3) Multi-tile grid + batch padding (B=20 not a multiple of tile_rows=8).
    B2 = 20
    q_mu2 = jax.random.normal(k5, (B2, L), dtype=jnp.float32)
    q_logvar2 = 0.1 * jax.random.normal(k6, (B2, L), dtype=jnp.float32)
    for red in ("mean", "sum", "none"):
        got = normal_kl_loss(q_mu2, q_logvar2, p_mu=None, p_logvar=None,
                             reduction=red, tile_rows=8)
        jax.block_until_ready(got)
        want = _reference(q_mu2, q_logvar2, reduction=red)
        assert jnp.allclose(got, want, rtol=1e-5, atol=1e-5), red

    # 4) bf16 inputs (bandwidth-halving path); compute stays f32 in-kernel.
    q_mu_bf = q_mu2.astype(jnp.bfloat16)
    q_logvar_bf = q_logvar2.astype(jnp.bfloat16)
    got_bf = normal_kl_loss(q_mu_bf, q_logvar_bf, reduction="mean", tile_rows=8)
    jax.block_until_ready(got_bf)
    want_bf = _reference(q_mu_bf, q_logvar_bf, reduction="mean")
    assert jnp.allclose(got_bf, want_bf, rtol=1e-4, atol=1e-4)

    print("KERNEL_OK")
</pallas_src>

<mosaic_0001>
module attributes {stable_mosaic.version = 11 : i64} {
  func.func @_kl_std_kernel(%arg0: i32, %arg1: memref<8x32xf32, #tpu.memory_space<vmem>>, %arg2: memref<8x32xf32, #tpu.memory_space<vmem>>, %arg3: memref<8x1xf32, #tpu.memory_space<vmem>>) attributes {dimension_semantics = [#tpu.dimension_semantics<parallel>], iteration_bounds = array<i64: 1>, scalar_prefetch = 0 : i64, scratch_operands = 0 : i64, tpu.core_type = #tpu.core_type<tc>, window_params = [{transform_indices = @transform_0, window_bounds = array<i64: 8, 32>}, {transform_indices = @transform_1, window_bounds = array<i64: 8, 32>}, {transform_indices = @transform_2, window_bounds = array<i64: 8, 1>}]} {
    %c0 = arith.constant 0 : index
    %c0_0 = arith.constant 0 : index
    %0 = vector.load %arg1[%c0, %c0_0] : memref<8x32xf32, #tpu.memory_space<vmem>>, vector<8x32xf32>
    %c0_1 = arith.constant 0 : index
    %c0_2 = arith.constant 0 : index
    %1 = vector.load %arg2[%c0_1, %c0_2] : memref<8x32xf32, #tpu.memory_space<vmem>>, vector<8x32xf32>
    %2 = math.exp %1 : vector<8x32xf32>
    %3 = arith.mulf %0, %0 : vector<8x32xf32>
    %4 = arith.addf %2, %3 : vector<8x32xf32>
    %5 = arith.subf %4, %1 : vector<8x32xf32>
    %cst = arith.constant 1.000000e+00 : f32
    %6 = vector.broadcast %cst : f32 to vector<8x32xf32>
    %7 = arith.subf %5, %6 : vector<8x32xf32>
    %cst_3 = arith.constant 5.000000e-01 : f32
    %8 = vector.broadcast %cst_3 : f32 to vector<8x32xf32>
    %9 = arith.mulf %8, %7 : vector<8x32xf32>
    %cst_4 = arith.constant dense<0.000000e+00> : vector<8xf32>
    %10 = vector.multi_reduction <add>, %9, %cst_4 [1] : vector<8x32xf32> to vector<8xf32>
    %11 = vector.shape_cast %10 : vector<8xf32> to vector<8x1xf32>
    %c0_5 = arith.constant 0 : index
    %c0_6 = arith.constant 0 : index
    %12 = vector.load %arg3[%c0_5, %c0_6] : memref<8x1xf32, #tpu.memory_space<vmem>>, vector<8x1xf32>
    tpu.vector_store %arg3[%c0_5, %c0_6], %11 {strides = array<i32>} : memref<8x1xf32, #tpu.memory_space<vmem>>, vector<8x1xf32>,
    return
  }
  func.func @transform_0(%arg0: i32) -> (i32, i32) {
    %c0_i32 = arith.constant 0 : i32
    %c0_i32_0 = arith.constant 0 : i32
    return %arg0, %c0_i32 : i32, i32
  }
  func.func @transform_1(%arg0: i32) -> (i32, i32) {
    %c0_i32 = arith.constant 0 : i32
    %c0_i32_0 = arith.constant 0 : i32
    return %arg0, %c0_i32 : i32, i32
  }
  func.func @transform_2(%arg0: i32) -> (i32, i32) {
    %c0_i32 = arith.constant 0 : i32
    %c0_i32_0 = arith.constant 0 : i32
    return %arg0, %c0_i32 : i32, i32
  }
}

</mosaic_0001>

<llo_original>
// kernel: tpu_custom_call.1
$region0: #{tpu_custom_call.1}
  #allocation0 [shape = 'u32[]', space=smem, size = 0x4, offset = 0x4, fixed_abs, tag = 'smem constant byte address 0x4 - core index']
  #allocation1 [shape = 'u32[144,128]{1,0:T(1,128)}', space=vmem, size = 0x12000, scoped, tag = 'internal scratch']
  %s0 = inlined_call_operand.hbm [shape: f32[8,32], index: 0, kind: input, shape index: {}]
  %s1 = inlined_call_operand.hbm [shape: f32[8,32], index: 1, kind: input, shape index: {}]
  %s2 = inlined_call_operand.vmem [shape: f32[8,1], index: 2, kind: output, shape index: {}]
  %s3 = sld [smem:[#allocation0]]
  $region26: #{tpu_custom_call.1} parent=0
    _
  %s5 = ssub.s32 1, %s3
  %s6 = scalar_select 0, %s5, %s3
  $region1: #{tpu_custom_call.1} parent=0
    #allocation2 [shape = 'u8[4096]{0}', space=vmem, size = 0x1000, scoped, tag = 'input window, operand 0, single buffered']
    #allocation3 [shape = 's32[1]{0}', space=sflag, size = 0x4, scoped, tag = 'scoped memory for tpu_custom_call.1']
    #allocation4 [shape = 'u8[4096]{0}', space=vmem, size = 0x1000, scoped, tag = 'input window, operand 1, single buffered']
    #allocation5 [shape = 's32[1]{0}', space=sflag, size = 0x4, scoped, tag = 'scoped memory for tpu_custom_call.1']
    %7 = vsyncpa [#allocation3], 0
    %8 = vsyncpa [#allocation5], 0
    // Predicated region
    $region2: #{tpu_custom_call.1} parent=1 // pred_check
      _
    $region3: #{tpu_custom_call.1} parent=1 // pred_check_branch
      %10 = sbr.rel (0) target = $region5
    $region4: #{tpu_custom_call.1} parent=1 // pred_region
      %s12 = ssub.s32 128, 128
      %13 = vsyncadd [#allocation3], %s12
      %s15 = sshll.u32 [#allocation2], 4
      %s16 = int_to_ptr.vmem [resolvable:$true] %s15
      %18 = dma.hbm_to_vmem [thread:$0]  %s0, 128, %s16, [#allocation3]
    $region5: #{tpu_custom_call.1} parent=1 // pred_fallthru
      _
    // Predicated region
    $region6: #{tpu_custom_call.1} parent=1 // pred_check
      _
    $region7: #{tpu_custom_call.1} parent=1 // pred_check_branch
      %20 = sbr.rel (0) target = $region9
    $region8: #{tpu_custom_call.1} parent=1 // pred_region
      %s22 = ssub.s32 128, 128
      %23 = vsyncadd [#allocation5], %s22
      %s25 = sshll.u32 [#allocation4], 4
      %s26 = int_to_ptr.vmem [resolvable:$true] %s25
      %28 = dma.hbm_to_vmem [thread:$0]  %s1, 128, %s26, [#allocation5]
    $region9: #{tpu_custom_call.1} parent=1 // pred_fallthru
      _
    // Predicated region
    $region10: #{tpu_custom_call.1} parent=1 // pred_check
      _
    $region11: #{tpu_custom_call.1} parent=1 // pred_check_branch
      %30 = sbr.rel (0) target = $region13
    $region12: #{tpu_custom_call.1} parent=1 // pred_region
      %31 = dma.done [#allocation3], 128
    $region13: #{tpu_custom_call.1} parent=1 // pred_fallthru
      _
    // Predicated region
    $region14: #{tpu_custom_call.1} parent=1 // pred_check
      _
    $region15: #{tpu_custom_call.1} parent=1 // pred_check_branch
      %33 = sbr.rel (0) target = $region17
    $region16: #{tpu_custom_call.1} parent=1 // pred_region
      %34 = dma.done [#allocation5], 128
    $region17: #{tpu_custom_call.1} parent=1 // pred_fallthru
      _
    %v35 = vld [vmem:[#allocation2] sm:$0xff]
    %v36 = vld [vmem:[#allocation4] sm:$0xff]
    %v37 = vmul.f32 %v36, 1.442695
    %v38 = vpow.pop %v37
    %v39 = vmul.f32 %v35, %v35
    %v40 = vadd.f32 %v38, %v39
    %v41 = vsub.f32 %v40, %v36
    %v42 = vsub.f32 %v41, 1.0
    %v43 = vmul.f32 %v42, 0.5
    %vm44 = vcmask 261120
    %v45 = vsel %vm44, %v43, 0.0
    %46 = vadd.xlane.f32.xlu0 %v45
    %v47 = vpop.xlane.xlu0 %46
    %vm48 = vcmask 7168
    %49 = vst.msk [vmem:[%s2] sm:$0xff] %vm48, %v47
    // Predicated region
    $region18: #{tpu_custom_call.1} parent=1 // pred_check
      _
    $region19: #{tpu_custom_call.1} parent=1 // pred_check_branch
      %51 = sbr.rel (0) target = $region21
    $region20: #{tpu_custom_call.1} parent=1 // pred_region
      _
    $region21: #{tpu_custom_call.1} parent=1 // pred_fallthru
      _
    // Predicated region
    $region22: #{tpu_custom_call.1} parent=1 // pred_check
      _
    $region23: #{tpu_custom_call.1} parent=1 // pred_check_branch
      %53 = sbr.rel (0) target = $region25
    $region24: #{tpu_custom_call.1} parent=1 // pred_region
      _
    $region25: #{tpu_custom_call.1} parent=1 // pred_fallthru
      _
    %54 = vsyncpa [#allocation3], 1
    %55 = vsyncpa [#allocation5], 1

</llo_original>
